<compile_context>
chip_gen: v7x
topology: tpu7x:2x2x1
jax: 0.10.0
libtpu: 0.0.40
codegen_flags: <defaults>
</compile_context>

<pallas_src>
import jax
import jax.numpy as jnp
from jax import lax
from jax.experimental import pallas as pl
from jax.experimental.pallas import tpu as pltpu

POOL_K = 31   # avg_pool2d kernel_size
POOL_P = 15   # avg_pool2d padding (stride=1, count_include_pad=True -> divisor 31*31)


def _bce_iou_kernel(pool_ref, pred_ref, mask_ref, out_ref):
    # pool_ref: (HW, HW) bf16 {0,1} Kronecker pooling band (resident across the grid)
    # pred_ref: (TB, HW) logits tile
    # mask_ref: (TB, HW) target tile (binary {0,1} -> bf16 cast is exact)
    # out_ref : (TB, 1)  per-image wbce + wiou
    p = pred_ref[...].astype(jnp.float32)
    m = mask_ref[...].astype(jnp.float32)

    # avg_pool2d(mask, k=31, s=1, p=15) == (m_flat @ kron(band_h, band_w)) / 961.
    pooled = jnp.dot(mask_ref[...].astype(jnp.bfloat16), pool_ref[...],
                     preferred_element_type=jnp.float32)
    pooled = pooled * (1.0 / float(POOL_K * POOL_K))

    weight = 1.0 + 5.0 * jnp.abs(pooled - m)

    # Stable BCE-with-logits and sigmoid share one exp(-|p|) and one divide.
    e = jnp.exp(-jnp.abs(p))
    bce = jnp.maximum(p, 0.0) - p * m + jnp.log1p(e)
    inv1pe = 1.0 / (1.0 + e)
    s = jnp.where(p >= 0.0, inv1pe, e * inv1pe)            # sigmoid(p)

    # iou = 1 - (inter+1)/(union-inter+1) == (union - 2*inter)/(union - inter + 1)
    sm = s * m                                             # inter
    u_minus_i = s + m - sm                                 # union - inter
    iou = (u_minus_i - sm) / (u_minus_i + 1.0)

    # Fused weighted reduction: (sum(w*bce)+sum(w*iou))/sum(w) == sum(w*(bce+iou))/sum(w).
    num = jnp.sum(weight * (bce + iou), axis=1, keepdims=True)   # (TB, 1)
    den = jnp.sum(weight, axis=1, keepdims=True)                 # (TB, 1)
    out_ref[...] = num / den


def _round_up(x, m):
    return ((x + m - 1) // m) * m


def _pick_row_tile(B, cap=512):
    # Row tile: multiple of 8 (sublane rule), as large as `cap` to amortize the
    # per-step pipeline overhead and fill the MXU M dim; but keep >= 2 grid steps
    # whenever B > 8 so the "parallel" axis feeds both v7x TensorCores.
    if B <= 8:
        return 8
    return min(cap, _round_up(pl.cdiv(B, 2), 8))


def _vmem_limit_bytes():
    # Generation-aware scoped-VMEM limit: physical capacity minus 16 MiB headroom
    # (v7x: 64 -> 48 MiB, v5e/v6e: 128 -> 112 MiB), conservative fallback otherwise.
    try:
        cap = int(getattr(pltpu.get_tpu_info(), "vmem_capacity_bytes", 0))
    except Exception:
        cap = 0
    if cap <= 0:
        return 48 * 1024 * 1024
    return max(32 * 1024 * 1024, cap - 16 * 1024 * 1024)


def bce_iou_loss(pred, mask):
    assert pred.shape == mask.shape
    N, C, H, W = pred.shape
    B, HW = N * C, H * W

    # Dense Kronecker pooling path is sized for small spatial dims: at HW<=2048 the
    # resident (HW,HW) bf16 band plus double-buffered (TB,HW) tiles fit v7x's 64 MiB.
    # TODO(synk): for larger H*W switch to separable (H,H)/(W,W) band matmuls on a
    # (TB,H,W) tile (and single-buffer the band specs) instead of kron(band_h, band_w).
    assert HW <= 2048, "dense Kronecker pooling path is for small spatial sizes"

    band_h = (jnp.abs(jnp.arange(H)[:, None] - jnp.arange(H)[None, :]) <= POOL_P
              ).astype(jnp.float32)
    band_w = (jnp.abs(jnp.arange(W)[:, None] - jnp.arange(W)[None, :]) <= POOL_P
              ).astype(jnp.float32)
    pool_mat = jnp.kron(band_h, band_w).astype(jnp.bfloat16)    # (HW, HW), {0,1}

    # Lane-dense layout, no wrapper dtype cast (kernel casts in-VMEM), so a bf16/int8
    # binary mask produced upstream is consumed directly with halved HBM traffic.
    p2 = pred.reshape(B, HW)
    m2 = mask.reshape(B, HW)

    TB = _pick_row_tile(B)
    B_pad = _round_up(B, TB)
    if B_pad != B:
        p2 = jnp.pad(p2, ((0, B_pad - B), (0, 0)))
        m2 = jnp.pad(m2, ((0, B_pad - B), (0, 0)))
    grid = (B_pad // TB,)

    per_image = pl.pallas_call(
        _bce_iou_kernel,
        out_shape=jax.ShapeDtypeStruct((B_pad, 1), jnp.float32),
        grid_spec=pltpu.PrefetchScalarGridSpec(
            num_scalar_prefetch=0,
            grid=grid,
            in_specs=[
                pl.BlockSpec((HW, HW), lambda i: (0, 0)),   # pooling matrix (resident)
                pl.BlockSpec((TB, HW), lambda i: (i, 0)),   # pred tile
                pl.BlockSpec((TB, HW), lambda i: (i, 0)),   # mask tile
            ],
            out_specs=pl.BlockSpec((TB, 1), lambda i: (i, 0)),
        ),
        compiler_params=pltpu.CompilerParams(
            dimension_semantics=("parallel",),
            vmem_limit_bytes=_vmem_limit_bytes(),
        ),
    )(pool_mat, p2, m2)

    # Padded rows yield finite values (weight >= 1 so the denominator is > 0);
    # slice them off before the mean so they never contribute.
    return jnp.mean(per_image[:B, 0])


def _reference(pred, mask):
    # Pure-JAX mirror of the PyTorch forward (per-pixel iou, as in the given module).
    pooled = lax.reduce_window(
        mask, 0.0, lax.add, (1, 1, POOL_K, POOL_K), (1, 1, 1, 1),
        [(0, 0), (0, 0), (POOL_P, POOL_P), (POOL_P, POOL_P)]) / float(POOL_K * POOL_K)
    weight = 1.0 + 5.0 * jnp.abs(pooled - mask)
    bce = jnp.maximum(pred, 0.0) - pred * mask + jnp.log1p(jnp.exp(-jnp.abs(pred)))
    s = jax.nn.sigmoid(pred)
    inter = s * mask
    union = s + mask
    iou = 1.0 - (inter + 1.0) / (union - inter + 1.0)
    w_sum = weight.sum(axis=(2, 3))
    wbce = (weight * bce).sum(axis=(2, 3)) / w_sum
    wiou = (weight * iou).sum(axis=(2, 3)) / w_sum
    return (wbce + wiou).mean()


if __name__ == "__main__":
    key = jax.random.PRNGKey(0)
    kp, km = jax.random.split(key)
    pred = jax.random.normal(kp, (2, 4, 16, 16), dtype=jnp.float32)               # logits
    mask = (jax.random.uniform(km, (2, 4, 16, 16)) > 0.5).astype(jnp.float32)      # binary mask

    loss = bce_iou_loss(pred, mask)
    jax.block_until_ready(loss)

    ref = _reference(pred, mask)
    assert jnp.allclose(loss, ref, rtol=1e-5, atol=1e-5), (float(loss), float(ref))
    print("KERNEL_OK")
</pallas_src>

<mosaic_0001>
module attributes {stable_mosaic.version = 11 : i64} {
  func.func @_bce_iou_kernel(%arg0: i32, %arg1: memref<256x256xbf16, #tpu.memory_space<vmem>>, %arg2: memref<8x256xf32, #tpu.memory_space<vmem>>, %arg3: memref<8x256xf32, #tpu.memory_space<vmem>>, %arg4: memref<8x1xf32, #tpu.memory_space<vmem>>) attributes {dimension_semantics = [#tpu.dimension_semantics<parallel>], iteration_bounds = array<i64: 1>, scalar_prefetch = 0 : i64, scratch_operands = 0 : i64, tpu.core_type = #tpu.core_type<tc>, window_params = [{pipeline_mode = #tpu.pipeline_mode<synchronous>, transform_indices = @transform_0, window_bounds = array<i64: 256, 256>}, {transform_indices = @transform_1, window_bounds = array<i64: 8, 256>}, {transform_indices = @transform_2, window_bounds = array<i64: 8, 256>}, {transform_indices = @transform_3, window_bounds = array<i64: 8, 1>}]} {
    %c0 = arith.constant 0 : index
    %c0_0 = arith.constant 0 : index
    %0 = vector.load %arg2[%c0, %c0_0] : memref<8x256xf32, #tpu.memory_space<vmem>>, vector<8x256xf32>
    %c0_1 = arith.constant 0 : index
    %c0_2 = arith.constant 0 : index
    %1 = vector.load %arg3[%c0_1, %c0_2] : memref<8x256xf32, #tpu.memory_space<vmem>>, vector<8x256xf32>
    %c0_3 = arith.constant 0 : index
    %c0_4 = arith.constant 0 : index
    %2 = vector.load %arg3[%c0_3, %c0_4] : memref<8x256xf32, #tpu.memory_space<vmem>>, vector<8x256xf32>
    %3 = arith.truncf %2 : vector<8x256xf32> to vector<8x256xbf16>
    %c0_5 = arith.constant 0 : index
    %c0_6 = arith.constant 0 : index
    %4 = vector.load %arg1[%c0_5, %c0_6] : memref<256x256xbf16, #tpu.memory_space<vmem>>, vector<256x256xbf16>
    %cst = arith.constant dense<0.000000e+00> : vector<8x256xf32>
    %5 = tpu.matmul %3, %4, %cst {dimension_numbers = #tpu.dot_dimension_numbers<[1], [0], [0], [1], [0, 0, 1, 1], [], []>} : vector<8x256xbf16>, vector<256x256xbf16>, vector<8x256xf32> -> vector<8x256xf32>
    %cst_7 = arith.constant 0.00104058278 : f32
    %6 = vector.broadcast %cst_7 : f32 to vector<8x256xf32>
    %7 = arith.mulf %5, %6 : vector<8x256xf32>
    %8 = arith.subf %7, %1 : vector<8x256xf32>
    %9 = math.absf %8 : vector<8x256xf32>
    %cst_8 = arith.constant 5.000000e+00 : f32
    %10 = vector.broadcast %cst_8 : f32 to vector<8x256xf32>
    %11 = arith.mulf %10, %9 : vector<8x256xf32>
    %cst_9 = arith.constant 1.000000e+00 : f32
    %12 = vector.broadcast %cst_9 : f32 to vector<8x256xf32>
    %13 = arith.addf %12, %11 : vector<8x256xf32>
    %14 = math.absf %0 : vector<8x256xf32>
    %cst_10 = arith.constant 0.000000e+00 : f32
    %15 = vector.broadcast %cst_10 : f32 to vector<8x256xf32>
    %16 = arith.subf %15, %14 : vector<8x256xf32>
    %17 = math.exp %16 : vector<8x256xf32>
    %cst_11 = arith.constant 0.000000e+00 : f32
    %18 = vector.broadcast %cst_11 : f32 to vector<8x256xf32>
    %19 = arith.maximumf %0, %18 : vector<8x256xf32>
    %20 = arith.mulf %0, %1 : vector<8x256xf32>
    %21 = arith.subf %19, %20 : vector<8x256xf32>
    %22 = math.log1p %17 : vector<8x256xf32>
    %23 = arith.addf %21, %22 : vector<8x256xf32>
    %cst_12 = arith.constant 1.000000e+00 : f32
    %24 = vector.broadcast %cst_12 : f32 to vector<8x256xf32>
    %25 = arith.addf %24, %17 : vector<8x256xf32>
    %cst_13 = arith.constant 1.000000e+00 : f32
    %26 = vector.broadcast %cst_13 : f32 to vector<8x256xf32>
    %27 = arith.divf %26, %25 : vector<8x256xf32>
    %cst_14 = arith.constant 0.000000e+00 : f32
    %28 = vector.broadcast %cst_14 : f32 to vector<8x256xf32>
    %29 = arith.cmpf oge, %0, %28 : vector<8x256xf32>
    %30 = arith.mulf %17, %27 : vector<8x256xf32>
    %31 = arith.select %29, %27, %30 : vector<8x256xi1>, vector<8x256xf32>
    %32 = arith.mulf %31, %1 : vector<8x256xf32>
    %33 = arith.addf %31, %1 : vector<8x256xf32>
    %34 = arith.subf %33, %32 : vector<8x256xf32>
    %35 = arith.subf %34, %32 : vector<8x256xf32>
    %cst_15 = arith.constant 1.000000e+00 : f32
    %36 = vector.broadcast %cst_15 : f32 to vector<8x256xf32>
    %37 = arith.addf %34, %36 : vector<8x256xf32>
    %38 = arith.divf %35, %37 : vector<8x256xf32>
    %39 = arith.addf %23, %38 : vector<8x256xf32>
    %40 = arith.mulf %13, %39 : vector<8x256xf32>
    %cst_16 = arith.constant dense<0.000000e+00> : vector<8xf32>
    %41 = vector.multi_reduction <add>, %40, %cst_16 [1] : vector<8x256xf32> to vector<8xf32>
    %42 = vector.shape_cast %41 : vector<8xf32> to vector<8x1xf32>
    %cst_17 = arith.constant dense<0.000000e+00> : vector<8xf32>
    %43 = vector.multi_reduction <add>, %13, %cst_17 [1] : vector<8x256xf32> to vector<8xf32>
    %44 = vector.shape_cast %43 : vector<8xf32> to vector<8x1xf32>
    %45 = arith.divf %42, %44 : vector<8x1xf32>
    %c0_18 = arith.constant 0 : index
    %c0_19 = arith.constant 0 : index
    %46 = vector.load %arg4[%c0_18, %c0_19] : memref<8x1xf32, #tpu.memory_space<vmem>>, vector<8x1xf32>
    tpu.vector_store %arg4[%c0_18, %c0_19], %45 {strides = array<i32>} : memref<8x1xf32, #tpu.memory_space<vmem>>, vector<8x1xf32>,
    return
  }
  func.func @transform_0(%arg0: i32) -> (i32, i32) {
    %c0_i32 = arith.constant 0 : i32
    %c0_i32_0 = arith.constant 0 : i32
    %c0_i32_1 = arith.constant 0 : i32
    return %c0_i32, %c0_i32_0 : i32, i32
  }
  func.func @transform_1(%arg0: i32) -> (i32, i32) {
    %c0_i32 = arith.constant 0 : i32
    %c0_i32_0 = arith.constant 0 : i32
    return %arg0, %c0_i32 : i32, i32
  }
  func.func @transform_2(%arg0: i32) -> (i32, i32) {
    %c0_i32 = arith.constant 0 : i32
    %c0_i32_0 = arith.constant 0 : i32
    return %arg0, %c0_i32 : i32, i32
  }
  func.func @transform_3(%arg0: i32) -> (i32, i32) {
    %c0_i32 = arith.constant 0 : i32
    %c0_i32_0 = arith.constant 0 : i32
    return %arg0, %c0_i32 : i32, i32
  }
}

</mosaic_0001>

<llo_original>
// kernel: tpu_custom_call.1
$region0: #{tpu_custom_call.1}
  #allocation0 [shape = 'u32[]', space=smem, size = 0x4, offset = 0x4, fixed_abs, tag = 'smem constant byte address 0x4 - core index']
  #allocation1 [shape = 'u32[144,128]{1,0:T(1,128)}', space=vmem, size = 0x12000, scoped, tag = 'internal scratch']
  %s0 = inlined_call_operand.hbm [shape: bf16[256,256], index: 0, kind: input, shape index: {}]
  %s1 = inlined_call_operand.hbm [shape: f32[8,256], index: 1, kind: input, shape index: {}]
  %s2 = inlined_call_operand.hbm [shape: f32[8,256], index: 2, kind: input, shape index: {}]
  %s3 = inlined_call_operand.vmem [shape: f32[8,1], index: 3, kind: output, shape index: {}]
  %s4 = sld [smem:[#allocation0]]
  $region34: #{tpu_custom_call.1} parent=0
    _
  %s6 = ssub.s32 1, %s4
  %s7 = scalar_select 0, %s6, %s4
  $region1: #{tpu_custom_call.1} parent=0
    #allocation2 [shape = 'u8[131072]{0}', space=vmem, size = 0x20000, scoped, tag = 'input window, operand 0, single buffered']
    #allocation3 [shape = 's32[1]{0}', space=sflag, size = 0x4, scoped, tag = 'scoped memory for tpu_custom_call.1']
    #allocation4 [shape = 'u8[8192]{0}', space=vmem, size = 0x2000, scoped, tag = 'input window, operand 1, single buffered']
    #allocation5 [shape = 's32[1]{0}', space=sflag, size = 0x4, scoped, tag = 'scoped memory for tpu_custom_call.1']
    #allocation6 [shape = 'u8[8192]{0}', space=vmem, size = 0x2000, scoped, tag = 'input window, operand 2, single buffered']
    %8 = vsyncpa [#allocation3], 0
    %9 = vsyncpa [#allocation5], 0
    // Predicated region
    $region2: #{tpu_custom_call.1} parent=1 // pred_check
      _
    $region3: #{tpu_custom_call.1} parent=1 // pred_check_branch
      %11 = sbr.rel (0) target = $region5
    $region4: #{tpu_custom_call.1} parent=1 // pred_region
      %s13 = ssub.s32 4096, 4096
      %14 = vsyncadd [#allocation3], %s13
      %s15 = sshll.u32 [#allocation2], 4
      %s16 = int_to_ptr.vmem [resolvable:$true] %s15
      %21 = dma.hbm_to_vmem [thread:$0]  %s0, 4096, %s16, [#allocation3], 128, 128, 8
    $region5: #{tpu_custom_call.1} parent=1 // pred_fallthru
      _
    // Predicated region
    $region6: #{tpu_custom_call.1} parent=1 // pred_check
      _
    $region7: #{tpu_custom_call.1} parent=1 // pred_check_branch
      %23 = sbr.rel (0) target = $region9
    $region8: #{tpu_custom_call.1} parent=1 // pred_region
      %s25 = ssub.s32 256, 256
      %26 = vsyncadd [#allocation5], %s25
      %s28 = sshll.u32 [#allocation4], 4
      %s29 = int_to_ptr.vmem [resolvable:$true] %s28
      %31 = dma.hbm_to_vmem [thread:$0]  %s1, 256, %s29, [#allocation5]
    $region9: #{tpu_custom_call.1} parent=1 // pred_fallthru
      _
    // Predicated region
    $region10: #{tpu_custom_call.1} parent=1 // pred_check
      _
    $region11: #{tpu_custom_call.1} parent=1 // pred_check_branch
      %33 = sbr.rel (0) target = $region13
    $region12: #{tpu_custom_call.1} parent=1 // pred_region
      %s35 = ssub.s32 256, 256
      %36 = vsyncadd [#allocation5], %s35
      %s38 = sshll.u32 [#allocation6], 4
      %s39 = int_to_ptr.vmem [resolvable:$true] %s38
      %41 = dma.hbm_to_vmem [thread:$0]  %s2, 256, %s39, [#allocation5]
    $region13: #{tpu_custom_call.1} parent=1 // pred_fallthru
      _
    // Predicated region
    $region14: #{tpu_custom_call.1} parent=1 // pred_check
      _
    $region15: #{tpu_custom_call.1} parent=1 // pred_check_branch
      %43 = sbr.rel (0) target = $region17
    $region16: #{tpu_custom_call.1} parent=1 // pred_region
      %44 = dma.done [#allocation3], 4096
    $region17: #{tpu_custom_call.1} parent=1 // pred_fallthru
      _
    // Predicated region
    $region18: #{tpu_custom_call.1} parent=1 // pred_check
      _
    $region19: #{tpu_custom_call.1} parent=1 // pred_check_branch
      %46 = sbr.rel (0) target = $region21
    $region20: #{tpu_custom_call.1} parent=1 // pred_region
      %47 = dma.done [#allocation5], 256
    $region21: #{tpu_custom_call.1} parent=1 // pred_fallthru
      _
    // Predicated region
    $region22: #{tpu_custom_call.1} parent=1 // pred_check
      _
    $region23: #{tpu_custom_call.1} parent=1 // pred_check_branch
      %49 = sbr.rel (0) target = $region25
    $region24: #{tpu_custom_call.1} parent=1 // pred_region
      %50 = dma.done [#allocation5], 256
    $region25: #{tpu_custom_call.1} parent=1 // pred_fallthru
      _
    %v51 = vld [vmem:[#allocation4] sm:$0xff]
    %v52 = vld [vmem:[#allocation4 + $0x8] sm:$0xff]
    %v53 = vld [vmem:[#allocation6] sm:$0xff]
    %v54 = vld [vmem:[#allocation6 + $0x8] sm:$0xff]
    %v55 = vpack.c.bf16 %v53, %v53
    %v56 = vpack.c.bf16 %v54, %v54
    %v57 = vld [vmem:[#allocation2] sm:$0xff]
    %v58 = vld [vmem:[#allocation2 + $0x8] sm:$0xff]
    %v59 = vld [vmem:[#allocation2 + $0x10] sm:$0xff]
    %v60 = vld [vmem:[#allocation2 + $0x18] sm:$0xff]
    %v61 = vld [vmem:[#allocation2 + $0x20] sm:$0xff]
    %v62 = vld [vmem:[#allocation2 + $0x28] sm:$0xff]
    %v63 = vld [vmem:[#allocation2 + $0x30] sm:$0xff]
    %v64 = vld [vmem:[#allocation2 + $0x38] sm:$0xff]
    %v65 = vld [vmem:[#allocation2 + $0x40] sm:$0xff]
    %v66 = vld [vmem:[#allocation2 + $0x48] sm:$0xff]
    %v67 = vld [vmem:[#allocation2 + $0x50] sm:$0xff]
    %v68 = vld [vmem:[#allocation2 + $0x58] sm:$0xff]
    %v69 = vld [vmem:[#allocation2 + $0x60] sm:$0xff]
    %v70 = vld [vmem:[#allocation2 + $0x68] sm:$0xff]
    %v71 = vld [vmem:[#allocation2 + $0x70] sm:$0xff]
    %v72 = vld [vmem:[#allocation2 + $0x78] sm:$0xff]
    %v73 = vld [vmem:[#allocation2 + $0x80] sm:$0xff]
    %v74 = vld [vmem:[#allocation2 + $0x88] sm:$0xff]
    %v75 = vld [vmem:[#allocation2 + $0x90] sm:$0xff]
    %v76 = vld [vmem:[#allocation2 + $0x98] sm:$0xff]
    %v77 = vld [vmem:[#allocation2 + $0xa0] sm:$0xff]
    %v78 = vld [vmem:[#allocation2 + $0xa8] sm:$0xff]
    %v79 = vld [vmem:[#allocation2 + $0xb0] sm:$0xff]
    %v80 = vld [vmem:[#allocation2 + $0xb8] sm:$0xff]
    %v81 = vld [vmem:[#allocation2 + $0xc0] sm:$0xff]
    %v82 = vld [vmem:[#allocation2 + $0xc8] sm:$0xff]
    %v83 = vld [vmem:[#allocation2 + $0xd0] sm:$0xff]
    %v84 = vld [vmem:[#allocation2 + $0xd8] sm:$0xff]
    %v85 = vld [vmem:[#allocation2 + $0xe0] sm:$0xff]
    %v86 = vld [vmem:[#allocation2 + $0xe8] sm:$0xff]
    %v87 = vld [vmem:[#allocation2 + $0xf0] sm:$0xff]
    %v88 = vld [vmem:[#allocation2 + $0xf8] sm:$0xff]
    %v121 = vunpack.c.l.b16 %v57
    %v122 = vunpack.c.h.b16 %v57
    %v123 = vunpack.c.l.b16 %v58
    %v124 = vunpack.c.h.b16 %v58
    %v125 = vunpack.c.l.b16 %v59
    %v126 = vunpack.c.h.b16 %v59
    %v127 = vunpack.c.l.b16 %v60
    %v128 = vunpack.c.h.b16 %v60
    %v129 = vunpack.c.l.b16 %v61
    %v130 = vunpack.c.h.b16 %v61
    %v131 = vunpack.c.l.b16 %v62
    %v132 = vunpack.c.h.b16 %v62
    %v133 = vunpack.c.l.b16 %v63
    %v134 = vunpack.c.h.b16 %v63
    %v135 = vunpack.c.l.b16 %v64
    %v136 = vunpack.c.h.b16 %v64
    %v137 = vunpack.c.l.b16 %v65
    %v138 = vunpack.c.h.b16 %v65
    %v139 = vunpack.c.l.b16 %v66
    %v140 = vunpack.c.h.b16 %v66
    %v141 = vunpack.c.l.b16 %v67
    %v142 = vunpack.c.h.b16 %v67
    %v143 = vunpack.c.l.b16 %v68
    %v144 = vunpack.c.h.b16 %v68
    %v145 = vunpack.c.l.b16 %v69
    %v146 = vunpack.c.h.b16 %v69
    %v147 = vunpack.c.l.b16 %v70
    %v148 = vunpack.c.h.b16 %v70
    %v149 = vunpack.c.l.b16 %v71
    %v150 = vunpack.c.h.b16 %v71
    %v151 = vunpack.c.l.b16 %v72
    %v152 = vunpack.c.h.b16 %v72
    %v153 = vunpack.c.l.b16 %v73
    %v154 = vunpack.c.h.b16 %v73
    %v155 = vunpack.c.l.b16 %v74
    %v156 = vunpack.c.h.b16 %v74
    %v157 = vunpack.c.l.b16 %v75
    %v158 = vunpack.c.h.b16 %v75
    %v159 = vunpack.c.l.b16 %v76
    %v160 = vunpack.c.h.b16 %v76
    %v161 = vunpack.c.l.b16 %v77
    %v162 = vunpack.c.h.b16 %v77
    %v163 = vunpack.c.l.b16 %v78
    %v164 = vunpack.c.h.b16 %v78
    %v165 = vunpack.c.l.b16 %v79
    %v166 = vunpack.c.h.b16 %v79
    %v167 = vunpack.c.l.b16 %v80
    %v168 = vunpack.c.h.b16 %v80
    %v169 = vunpack.c.l.b16 %v81
    %v170 = vunpack.c.h.b16 %v81
    %v171 = vunpack.c.l.b16 %v82
    %v172 = vunpack.c.h.b16 %v82
    %v173 = vunpack.c.l.b16 %v83
    %v174 = vunpack.c.h.b16 %v83
    %v175 = vunpack.c.l.b16 %v84
    %v176 = vunpack.c.h.b16 %v84
    %v177 = vunpack.c.l.b16 %v85
    %v178 = vunpack.c.h.b16 %v85
    %v179 = vunpack.c.l.b16 %v86
    %v180 = vunpack.c.h.b16 %v86
    %v181 = vunpack.c.l.b16 %v87
    %v182 = vunpack.c.h.b16 %v87
    %v183 = vunpack.c.l.b16 %v88
    %v184 = vunpack.c.h.b16 %v88
    %v185 = vpack.c.b16 %v123, %v121
    %v186 = vpack.c.b16 %v124, %v122
    %v187 = vpack.c.b16 %v127, %v125
    %v188 = vpack.c.b16 %v128, %v126
    %v189 = vpack.c.b16 %v131, %v129
    %v190 = vpack.c.b16 %v132, %v130
    %v191 = vpack.c.b16 %v135, %v133
    %v192 = vpack.c.b16 %v136, %v134
    %v193 = vpack.c.b16 %v139, %v137
    %v194 = vpack.c.b16 %v140, %v138
    %v195 = vpack.c.b16 %v143, %v141
    %v196 = vpack.c.b16 %v144, %v142
    %v197 = vpack.c.b16 %v147, %v145
    %v198 = vpack.c.b16 %v148, %v146
    %v199 = vpack.c.b16 %v151, %v149
    %v200 = vpack.c.b16 %v152, %v150
    %v201 = vpack.c.b16 %v155, %v153
    %v202 = vpack.c.b16 %v156, %v154
    %v203 = vpack.c.b16 %v159, %v157
    %v204 = vpack.c.b16 %v160, %v158
    %v205 = vpack.c.b16 %v163, %v161
    %v206 = vpack.c.b16 %v164, %v162
    %v207 = vpack.c.b16 %v167, %v165
    %v208 = vpack.c.b16 %v168, %v166
    %v209 = vpack.c.b16 %v171, %v169
    %v210 = vpack.c.b16 %v172, %v170
    %v211 = vpack.c.b16 %v175, %v173
    %v212 = vpack.c.b16 %v176, %v174
    %v213 = vpack.c.b16 %v179, %v177
    %v214 = vpack.c.b16 %v180, %v178
    %v215 = vpack.c.b16 %v183, %v181
    %v216 = vpack.c.b16 %v184, %v182
    %249 = vmatprep.subr.bf16.mxu0 %v186
    %250 = vmatpush1.bf16.msra.mxu0 %v185
    %251 = vmatprep.subr.bf16.mxu0 %v188
    %252 = vmatpush1.bf16.msra.mxu0 %v187
    %253 = vmatprep.subr.bf16.mxu0 %v190
    %254 = vmatpush1.bf16.msra.mxu0 %v189
    %255 = vmatprep.subr.bf16.mxu0 %v192
    %256 = vmatpush1.bf16.msra.mxu0 %v191
    %257 = vmatprep.subr.bf16.mxu0 %v194
    %258 = vmatpush1.bf16.msra.mxu0 %v193
    %259 = vmatprep.subr.bf16.mxu0 %v196
    %260 = vmatpush1.bf16.msra.mxu0 %v195
    %261 = vmatprep.subr.bf16.mxu0 %v198
    %262 = vmatpush1.bf16.msra.mxu0 %v197
    %263 = vmatprep.subr.bf16.mxu0 %v200
    %264 = vmatpush1.bf16.msra.mxu0 %v199
    %265 = vmatprep.subr.bf16.mxu0 %v202
    %266 = vmatpush1.bf16.msra.mxu0 %v201
    %267 = vmatprep.subr.bf16.mxu0 %v204
    %268 = vmatpush1.bf16.msra.mxu0 %v203
    %269 = vmatprep.subr.bf16.mxu0 %v206
    %270 = vmatpush1.bf16.msra.mxu0 %v205
    %271 = vmatprep.subr.bf16.mxu0 %v208
    %272 = vmatpush1.bf16.msra.mxu0 %v207
    %273 = vmatprep.subr.bf16.mxu0 %v210
    %274 = vmatpush1.bf16.msra.mxu0 %v209
    %275 = vmatprep.subr.bf16.mxu0 %v212
    %276 = vmatpush1.bf16.msra.mxu0 %v211
    %277 = vmatprep.subr.bf16.mxu0 %v214
    %278 = vmatpush1.bf16.msra.mxu0 %v213
    %279 = vmatprep.subr.bf16.mxu0 %v216
    %280 = vmatpush1.bf16.msra.mxu0 %v215
    %281 = vmatprep.mubr.bf16.mxu0 %v56
    %282 = vmatmul.mubr.bf16.gmra.mrb[0].mxu0 %v55
    %v283 = vpop.f32.mrb[0].mxu0
    %v284 = vadd.f32 0.0, %v283
    %v285 = vpop.f32.mrb[0].mxu0
    %v286 = vadd.f32 0.0, %v285
    %v287 = vpop.f32.mrb[0].mxu0
    %v288 = vpop.f32.mrb[0].mxu0
    %289 = vdwg.mxu0
    %v290 = vmul.f32 %v284, 0.0010405828
    %v291 = vmul.f32 %v286, 0.0010405828
    %v292 = vsub.f32 %v290, %v53
    %v293 = vsub.f32 %v291, %v54
    %v294 = vand.u32 2147483647, %v292
    %v295 = vand.u32 2147483647, %v293
    %v296 = vmul.f32 %v294, 5.0
    %v297 = vmul.f32 %v295, 5.0
    %v298 = vadd.f32 %v296, 1.0
    %v299 = vadd.f32 %v297, 1.0
    %v300 = vand.u32 2147483647, %v51
    %v301 = vand.u32 2147483647, %v52
    %v302 = vsub.f32 0.0, %v300
    %v303 = vsub.f32 0.0, %v301
    %v304 = vmul.f32 %v302, 1.442695
    %v305 = vpow.pop %v304
    %v306 = vmul.f32 %v303, 1.442695
    %v307 = vpow.pop %v306
    %v308 = vmax.f32 %v51, 0.0
    %v309 = vmax.f32 %v52, 0.0
    %v310 = vmul.f32 %v51, %v53
    %v311 = vmul.f32 %v52, %v54
    %v312 = vsub.f32 %v308, %v310
    %v313 = vsub.f32 %v309, %v311
    %v314 = vadd.f32 %v305, 1.0
    %v315 = vlog2.pop %v314
    %v316 = vmul.f32 %v315, 0.6931472
    %v317 = vmul.f32 -0.5, %v305
    %v318 = vadd.f32 %v317, 1.0
    %v319 = vmul.f32 %v318, %v305
    %v320 = vand.u32 2147483647, %v305
    %vm321 = vcmp.lt.f32.partialorder %v320, 0.0004427343
    %v322 = vsel %vm321, %v319, %v316
    %v323 = vadd.f32 %v307, 1.0
    %v324 = vlog2.pop %v323
    %v325 = vmul.f32 %v324, 0.6931472
    %v326 = vmul.f32 -0.5, %v307
    %v327 = vadd.f32 %v326, 1.0
    %v328 = vmul.f32 %v327, %v307
    %v329 = vand.u32 2147483647, %v307
    %vm330 = vcmp.lt.f32.partialorder %v329, 0.0004427343
    %v331 = vsel %vm330, %v328, %v325
    %v332 = vadd.f32 %v312, %v322
    %v333 = vadd.f32 %v313, %v331
    %v334 = vadd.f32 %v305, 1.0
    %v335 = vadd.f32 %v307, 1.0
    %v336 = vrcp.pop %v334
    %v337 = vmul.f32 1.0, %v336
    %v338 = vrcp.pop %v335
    %v339 = vmul.f32 1.0, %v338
    %vm340 = vcmp.ge.f32.partialorder %v51, 0.0
    %vm341 = vcmp.ge.f32.partialorder %v52, 0.0
    %v342 = vmul.f32 %v305, %v337
    %v343 = vmul.f32 %v307, %v339
    %v344 = vsel %vm340, %v337, %v342
    %v345 = vsel %vm341, %v339, %v343
    %v346 = vmul.f32 %v344, %v53
    %v347 = vmul.f32 %v345, %v54
    %v348 = vadd.f32 %v344, %v53
    %v349 = vadd.f32 %v345, %v54
    %v350 = vsub.f32 %v348, %v346
    %v351 = vsub.f32 %v349, %v347
    %v352 = vsub.f32 %v350, %v346
    %v353 = vsub.f32 %v351, %v347
    %v354 = vadd.f32 %v350, 1.0
    %v355 = vadd.f32 %v351, 1.0
    %v356 = vrcp.pop %v354
    %v357 = vmul.f32 %v352, %v356
    %v358 = vrcp.pop %v355
    %v359 = vmul.f32 %v353, %v358
    %v360 = vadd.f32 %v332, %v357
    %v361 = vadd.f32 %v333, %v359
    %v362 = vmul.f32 %v298, %v360
    %v363 = vmul.f32 %v299, %v361
    %v364 = vadd.f32 %v362, %v363
    %365 = vadd.xlane.f32.xlu0 %v364
    %v366 = vpop.xlane.xlu0 %365
    %v367 = vadd.f32 %v298, %v299
    %368 = vadd.xlane.f32.xlu0 %v367
    %v369 = vpop.xlane.xlu0 %368
    %v370 = vrcp.pop %v369
    %v371 = vmul.f32 %v366, %v370
    %vm372 = vcmask 7168
    %373 = vst.msk [vmem:[%s3] sm:$0xff] %vm372, %v371
    // Predicated region
    $region26: #{tpu_custom_call.1} parent=1 // pred_check
      _
    $region27: #{tpu_custom_call.1} parent=1 // pred_check_branch
      %375 = sbr.rel (0) target = $region29
    $region28: #{tpu_custom_call.1} parent=1 // pred_region
      _
    $region29: #{tpu_custom_call.1} parent=1 // pred_fallthru
      _
    // Predicated region
    $region30: #{tpu_custom_call.1} parent=1 // pred_check
      _
    $region31: #{tpu_custom_call.1} parent=1 // pred_check_branch
      %377 = sbr.rel (0) target = $region33
    $region32: #{tpu_custom_call.1} parent=1 // pred_region
      _
    $region33: #{tpu_custom_call.1} parent=1 // pred_fallthru
      _
    %378 = vsyncpa [#allocation3], 1
    %379 = vsyncpa [#allocation5], 1

</llo_original>
